<compile_context>
chip_gen: v5e
topology: v5e:2x2
jax: 0.10.0
libtpu: 0.0.40
codegen_flags: <defaults>
</compile_context>

<pallas_src>
import functools
import numpy as np
import jax
import jax.numpy as jnp
from jax.experimental import pallas as pl
from jax.experimental.pallas import tpu as pltpu


# ----------------------------------------------------------------------------
# Host-side constants
# ----------------------------------------------------------------------------
def make_dct_matrix(n: int) -> jnp.ndarray:
    """Orthonormal DCT-II matrix D s.t. dct(v, norm='ortho') = D @ v (1D)."""
    k = np.arange(n)[:, None]
    m = np.arange(n)[None, :]
    D = np.cos(np.pi * (m + 0.5) * k / n) * np.sqrt(2.0 / n)
    D[0, :] *= 1.0 / np.sqrt(2.0)
    return jnp.asarray(D, dtype=jnp.float32)


def make_freqs(n: int) -> jnp.ndarray:
    return jnp.asarray(np.pi * np.linspace(0, n - 1, n) / n, dtype=jnp.float32)


def _blur_matrices(fwd_steps, blur_sigmas, n):
    """M_b = D^T @ diag(exp(-f^2 * t_b)) @ D  -> (B, n, n), symmetric, f32.

    Exact algebraic fold of the reference: frequencies_squared[i,j] =
    f_i^2 + f_j^2 is rank-1 separable, so exp(-F*t) = a_i * a_j with
    a = exp(-f^2 * t), and the whole op becomes out = M x M.
    """
    D = make_dct_matrix(n)                                           # (n, n)
    f = make_freqs(n)                                                # (n,)
    t = (blur_sigmas[fwd_steps].astype(jnp.float32) ** 2) / 2.0      # (B,)
    a = jnp.exp(-(f ** 2)[None, :] * t[:, None])                     # (B, n)
    return jnp.einsum('ji,bj,jk->bik', D, a, D)                      # (B, n, n)


# ----------------------------------------------------------------------------
# Kernels
# ----------------------------------------------------------------------------
def _dct_blur_kron_kernel(x_ref, k_ref, o_ref, *, compute_dtype):
    # x_ref: (Nb, C, H*W)   k_ref: (Nb, H*W, H*W)   o_ref: (Nb, C, H*W)
    # One batched matmul; the batch dim b has a distinct Kron matrix per slab.
    x = x_ref[...].astype(compute_dtype)
    k = k_ref[...]
    o_ref[...] = jnp.einsum(
        'bcp,bpq->bcq', x, k,
        preferred_element_type=jnp.float32).astype(o_ref.dtype)


def _dct_blur_matmul_kernel(x_ref, m_ref, o_ref, *, compute_dtype):
    # x_ref: (Nb, C, H, W)   m_ref: (Nb, H, H)   o_ref: (Nb, C, H, W)
    nb, c, h, w = x_ref.shape

    def body(i, carry):
        xb = x_ref[i].astype(compute_dtype)                  # (C, H, W)
        mb = m_ref[i].astype(compute_dtype)                  # (H, H), symmetric
        # Right contraction over W, fused over all channels (x_c @ M).
        y = jnp.dot(xb.reshape(c * h, w), mb,
                    preferred_element_type=jnp.float32)      # (C*H, W) f32
        # Left contraction over H, fused over channels via a transpose (XLU):
        # out_c^T = y_c^T @ M  (M symmetric).
        yt = jnp.transpose(y.reshape(c, h, w), (0, 2, 1)).reshape(c * w, h)
        zt = jnp.dot(yt.astype(compute_dtype), mb,
                     preferred_element_type=jnp.float32)     # (C*W, H)
        z = jnp.transpose(zt.reshape(c, w, h), (0, 2, 1))    # (C, H, W)
        o_ref[i] = z.astype(o_ref.dtype)
        return carry

    jax.lax.fori_loop(0, nb, body, 0, unroll=True)


# ----------------------------------------------------------------------------
# Wrapper
# ----------------------------------------------------------------------------
def _pick_nb(batch, per_batch_bytes, target_bytes=2 << 20):
    """Largest divisor of `batch` keeping the per-step payload ~<= target,
    while leaving >= 2 grid steps when batch >= 2 (v7x megacore)."""
    cap = max(1, target_bytes // max(per_batch_bytes, 1))
    if batch >= 2:
        cap = min(cap, max(1, batch // 2))
    nb = 1
    for d in range(1, batch + 1):
        if batch % d == 0 and d <= cap:
            nb = d
    return nb


def dct_blur(x, fwd_steps, blur_sigmas, image_size, compute_dtype=jnp.float32):
    """Pallas TPU implementation of DCTBlur.forward.

    x: (B, C, H, W) or (B, H, W) float32; fwd_steps: (B,) int32;
    blur_sigmas: (num_steps,) float32.  Returns same shape/dtype as x.
    compute_dtype=jnp.bfloat16 casts MXU operands in-kernel (f32 accumulation);
    validate with ~1e-2 tolerance in that case.  Default stays f32.
    """
    orig_shape = x.shape
    if x.ndim == 3:
        B, H, W = x.shape
        C = 1
    else:
        B, C, H, W = x.shape
    assert H == image_size and W == image_size, "image_size mismatch"

    M = _blur_matrices(fwd_steps, blur_sigmas, H)             # (B, H, H) f32
    itemsize = jnp.dtype(x.dtype).itemsize
    cd_itemsize = jnp.dtype(compute_dtype).itemsize

    if H <= 32:
        # ---------------- Kronecker path ----------------
        HW = H * W
        # K[b, (k,l), (i,j)] = M[b,i,k] * M[b,j,l]
        #   => out[c,i,j] = sum_{k,l} M[i,k] x[c,k,l] M[j,l]
        K = jnp.einsum('bik,bjl->bklij', M, M).reshape(B, HW, HW)
        K = K.astype(compute_dtype)
        xr = x.reshape(B, C, HW)          # free reshape of the NCHW layout

        k_bytes = HW * HW * cd_itemsize
        per_batch = 2 * C * HW * itemsize + k_bytes
        nb = _pick_nb(B, per_batch)
        need = 2 * nb * per_batch         # double-buffered in/out/K blocks
        flops = 2 * B * C * HW * HW
        bytes_accessed = 2 * B * C * HW * itemsize + B * k_bytes

        out = pl.pallas_call(
            functools.partial(_dct_blur_kron_kernel, compute_dtype=compute_dtype),
            out_shape=jax.ShapeDtypeStruct((B, C, HW), x.dtype),
            grid_spec=pltpu.PrefetchScalarGridSpec(
                num_scalar_prefetch=0,
                grid=(B // nb,),
                in_specs=[
                    pl.BlockSpec((nb, C, HW), lambda b: (b, 0, 0)),
                    pl.BlockSpec((nb, HW, HW), lambda b: (b, 0, 0)),
                ],
                out_specs=pl.BlockSpec((nb, C, HW), lambda b: (b, 0, 0)),
            ),
            compiler_params=pltpu.CompilerParams(
                dimension_semantics=("parallel",),
                vmem_limit_bytes=int(min(32 << 20, max(16 << 20, 2 * need)))),
            cost_estimate=pl.CostEstimate(
                flops=int(flops), transcendentals=0,
                bytes_accessed=int(bytes_accessed)),
        )(xr, K)
        return out.reshape(orig_shape)

    # ---------------- large-image path (H > 32) ----------------
    m_bytes = H * H * cd_itemsize
    per_batch = 2 * C * H * W * itemsize + m_bytes
    nb = _pick_nb(B, per_batch)
    need = 2 * nb * per_batch
    flops = 4 * B * C * H * H * W
    bytes_accessed = 2 * B * C * H * W * itemsize + B * m_bytes

    xr = x.reshape(B, C, H, W)
    out = pl.pallas_call(
        functools.partial(_dct_blur_matmul_kernel, compute_dtype=compute_dtype),
        out_shape=jax.ShapeDtypeStruct((B, C, H, W), x.dtype),
        grid_spec=pltpu.PrefetchScalarGridSpec(
            num_scalar_prefetch=0,
            grid=(B // nb,),
            in_specs=[
                pl.BlockSpec((nb, C, H, W), lambda b: (b, 0, 0, 0)),
                pl.BlockSpec((nb, H, H), lambda b: (b, 0, 0)),
            ],
            out_specs=pl.BlockSpec((nb, C, H, W), lambda b: (b, 0, 0, 0)),
        ),
        compiler_params=pltpu.CompilerParams(
            dimension_semantics=("parallel",),
            vmem_limit_bytes=int(min(32 << 20, max(16 << 20, 2 * need)))),
        cost_estimate=pl.CostEstimate(
            flops=int(flops), transcendentals=0,
            bytes_accessed=int(bytes_accessed)),
    )(xr, M.astype(compute_dtype))
    return out.reshape(orig_shape)


# ----------------------------------------------------------------------------
# Pure-JAX reference (original 4-matmul + exp formulation)
# ----------------------------------------------------------------------------
def dct_blur_reference(x, fwd_steps, blur_sigmas, image_size):
    D = make_dct_matrix(image_size)
    f = make_freqs(image_size)
    F = f[:, None] ** 2 + f[None, :] ** 2
    sigmas = blur_sigmas[fwd_steps][:, None, None, None]
    t = sigmas ** 2 / 2.0
    dct = jnp.einsum('ij,bcjk,lk->bcil', D, x, D)
    dct = dct * jnp.exp(-F[None, None] * t)
    out = jnp.einsum('ji,bcjk,kl->bcil', D, dct, D)
    return out


if __name__ == "__main__":
    B, C, H = 2, 4, 16
    num_steps = 8

    key = jax.random.PRNGKey(0)
    kx, ks = jax.random.split(key)
    x = jax.random.normal(kx, (B, C, H, H), dtype=jnp.float32)
    fwd_steps = jax.random.randint(ks, (B,), 0, num_steps, dtype=jnp.int32)

    # Deterministic "blur_sigmas" schedule (as would be passed to __init__).
    blur_sigmas = jnp.exp(jnp.linspace(jnp.log(0.5), jnp.log(20.0), num_steps)
                          ).astype(jnp.float32)

    out = dct_blur(x, fwd_steps, blur_sigmas, H)
    out = jax.block_until_ready(out)

    ref = dct_blur_reference(x, fwd_steps, blur_sigmas, H)
    np.testing.assert_allclose(np.asarray(out), np.asarray(ref),
                               rtol=1e-4, atol=1e-4)

    print("KERNEL_OK")
</pallas_src>

<mosaic_0001>
module attributes {stable_mosaic.version = 11 : i64} {
  func.func @_dct_blur_kron_kernel(%arg0: i32, %arg1: memref<1x4x256xf32, #tpu.memory_space<vmem>>, %arg2: memref<1x256x256xf32, #tpu.memory_space<vmem>>, %arg3: memref<1x4x256xf32, #tpu.memory_space<vmem>>) attributes {dimension_semantics = [#tpu.dimension_semantics<parallel>], iteration_bounds = array<i64: 2>, scalar_prefetch = 0 : i64, scratch_operands = 0 : i64, tpu.core_type = #tpu.core_type<tc>, window_params = [{transform_indices = @transform_0, window_bounds = array<i64: 1, 4, 256>}, {transform_indices = @transform_1, window_bounds = array<i64: 1, 256, 256>}, {transform_indices = @transform_2, window_bounds = array<i64: 1, 4, 256>}]} {
    %c0 = arith.constant 0 : index
    %c0_0 = arith.constant 0 : index
    %c0_1 = arith.constant 0 : index
    %0 = vector.load %arg1[%c0, %c0_0, %c0_1] : memref<1x4x256xf32, #tpu.memory_space<vmem>>, vector<1x4x256xf32>
    %c0_2 = arith.constant 0 : index
    %c0_3 = arith.constant 0 : index
    %c0_4 = arith.constant 0 : index
    %1 = vector.load %arg2[%c0_2, %c0_3, %c0_4] : memref<1x256x256xf32, #tpu.memory_space<vmem>>, vector<1x256x256xf32>
    "tpu.trace_start"() <{level = 10 : i32, message = "bcp,bpq->bcq"}> : () -> ()
    %cst = arith.constant dense<0.000000e+00> : vector<1x4x256xf32>
    %2 = tpu.matmul %0, %1, %cst {dimension_numbers = #tpu.dot_dimension_numbers<[2], [1], [1], [2], [0, 0, 0, 1, 1, 2], [0], [0]>} : vector<1x4x256xf32>, vector<1x256x256xf32>, vector<1x4x256xf32> -> vector<1x4x256xf32>
    "tpu.trace_stop"() : () -> ()
    %c0_5 = arith.constant 0 : index
    %c0_6 = arith.constant 0 : index
    %c0_7 = arith.constant 0 : index
    %3 = vector.load %arg3[%c0_5, %c0_6, %c0_7] : memref<1x4x256xf32, #tpu.memory_space<vmem>>, vector<1x4x256xf32>
    tpu.vector_store %arg3[%c0_5, %c0_6, %c0_7], %2 {strides = array<i32>} : memref<1x4x256xf32, #tpu.memory_space<vmem>>, vector<1x4x256xf32>,
    return
  }
  func.func @transform_0(%arg0: i32) -> (i32, i32, i32) {
    %c0_i32 = arith.constant 0 : i32
    %c0_i32_0 = arith.constant 0 : i32
    %c0_i32_1 = arith.constant 0 : i32
    return %arg0, %c0_i32, %c0_i32_0 : i32, i32, i32
  }
  func.func @transform_1(%arg0: i32) -> (i32, i32, i32) {
    %c0_i32 = arith.constant 0 : i32
    %c0_i32_0 = arith.constant 0 : i32
    %c0_i32_1 = arith.constant 0 : i32
    return %arg0, %c0_i32, %c0_i32_0 : i32, i32, i32
  }
  func.func @transform_2(%arg0: i32) -> (i32, i32, i32) {
    %c0_i32 = arith.constant 0 : i32
    %c0_i32_0 = arith.constant 0 : i32
    %c0_i32_1 = arith.constant 0 : i32
    return %arg0, %c0_i32, %c0_i32_0 : i32, i32, i32
  }
}

</mosaic_0001>

<llo_original>
// kernel: tpu_custom_call.1
$region0: #{tpu_custom_call.1}
  #allocation0 [shape = 'u32[]', space=smem, size = 0x4, offset = 0x4, fixed_abs, tag = 'smem constant byte address 0x4 - core index']
  #allocation1 [shape = 'u32[72,128]{1,0:T(1,128)}', space=vmem, size = 0x9000, scoped, tag = 'internal scratch']
  %s0 = inlined_call_operand.hbm [shape: f32[2,4,256], index: 0, kind: input, shape index: {}]
  %s1 = inlined_call_operand.hbm [shape: f32[2,256,256], index: 1, kind: input, shape index: {}]
  %s2 = inlined_call_operand.hbm [shape: f32[2,4,256], index: 2, kind: output, shape index: {}]
  %s3 = sld [smem:[#allocation0]]
  $region49: #{tpu_custom_call.1} parent=0
    _
  %s5 = ssub.s32 1, %s3
  %s6 = scalar_select 0, %s5, %s3
  $region1: #{tpu_custom_call.1} parent=0
    #allocation2 [shape = 'u8[8192]{0}', space=vmem, size = 0x2000, scoped, tag = 'input window, operand 0']
    #allocation3 [shape = 's32[2]{0}', space=sflag, size = 0x8, scoped, tag = 'scoped memory for tpu_custom_call.1']
    #allocation4 [shape = 's32[2]{0}', space=sflag, size = 0x8, scoped, tag = 'scoped memory for tpu_custom_call.1']
    #allocation5 [shape = 'u8[524288]{0}', space=vmem, size = 0x80000, scoped, tag = 'input window, operand 1']
    #allocation6 [shape = 's32[2]{0}', space=sflag, size = 0x8, scoped, tag = 'scoped memory for tpu_custom_call.1']
    #allocation7 [shape = 'u8[8192]{0}', space=vmem, size = 0x2000, scoped, tag = 'output window, operand 0']
    %7 = vsyncpa [#allocation3], 0
    %s8 = scalar_lea.sflag [#allocation3], 1
    %9 = vsyncpa %s8, 0
    %10 = vsyncpa [#allocation6], 0
    %s11 = scalar_lea.sflag [#allocation6], 1
    %12 = vsyncpa %s11, 0
    %13 = vsyncpa [#allocation4], 0
    %s14 = scalar_lea.sflag [#allocation4], 1
    %15 = vsyncpa %s14, 0
    loop: start=0, step=1, limit=4
    $region2: #{tpu_custom_call.1} parent=1 // loop_pre_header
      _
    $region3: #{tpu_custom_call.1} parent=1 // loop_header
      %s17 = sphi 0, %s21
      %p18 = scmp.ge.s32.totalorder %s17, 4
      %s27 = sphi 0, %s29
      %s30 = sphi 0, %s27
      %s31 = sphi 0, %s30
      %s47 = sphi 0, %s31
      %s53 = sphi 0, %s55
      %s56 = sphi 0, %s53
      %s57 = sphi 0, %s56
      %s73 = sphi 0, %s57
      %s79 = sphi 0, %s81
      %s82 = sphi 0, %s79
      %s83 = sphi 0, %s82
      %s99 = sphi 0, %s83
    $region4: #{tpu_custom_call.1} parent=1 // loop_header_branch
      %20 = sbr.rel (%p18) target = $region8
    $region5: #{tpu_custom_call.1} parent=1 // loop_body
      %s22 = ssub.s32 %s17, 1
      %s23 = ssub.s32 %s17, 2
      %s24 = sadd.s32 %s17, 1
      %s25 = ssub.s32 %s17, %s24
      %p26 = scmp.eq.s32.totalorder %s25, 0
      %s28 = sadd.s32 %s27, 1
      %s29 = scalar_select %p26, %s27, %s28
      %p32 = pneg %p26
      %p33 = scmp.eq.s32.totalorder %s17, 1
      %p34 = por %p32, %p33
      %p35 = scmp.ne.s32.totalorder %s27, %s30
      %p36 = scmp.eq.s32.totalorder %s17, 0
      %p37 = por %p35, %p36
      %p38 = scmp.ne.s32.totalorder %s27, %s30
      %p39 = scmp.eq.s32.totalorder %s22, 1
      %p40 = por %p38, %p39
      %p41 = scmp.ne.s32.totalorder %s30, %s31
      %p42 = scmp.eq.s32.totalorder %s22, 0
      %p43 = por %p41, %p42
      %p44 = scmp.ne.s32.totalorder %s30, %s31
      %p45 = scmp.eq.s32.totalorder %s23, 1
      %p46 = por %p44, %p45
      %p48 = scmp.ne.s32.totalorder %s31, %s47
      %p49 = scmp.eq.s32.totalorder %s23, 0
      %p50 = por %p48, %p49
      %s51 = ssub.s32 %s17, %s24
      %p52 = scmp.eq.s32.totalorder %s51, 0
      %s54 = sadd.s32 %s53, 1
      %s55 = scalar_select %p52, %s53, %s54
      %p58 = pneg %p52
      %p59 = scmp.eq.s32.totalorder %s17, 1
      %p60 = por %p58, %p59
      %p61 = scmp.ne.s32.totalorder %s53, %s56
      %p62 = scmp.eq.s32.totalorder %s17, 0
      %p63 = por %p61, %p62
      %p64 = scmp.ne.s32.totalorder %s53, %s56
      %p65 = scmp.eq.s32.totalorder %s22, 1
      %p66 = por %p64, %p65
      %p67 = scmp.ne.s32.totalorder %s56, %s57
      %p68 = scmp.eq.s32.totalorder %s22, 0
      %p69 = por %p67, %p68
      %p70 = scmp.ne.s32.totalorder %s56, %s57
      %p71 = scmp.eq.s32.totalorder %s23, 1
      %p72 = por %p70, %p71
      %p74 = scmp.ne.s32.totalorder %s57, %s73
      %p75 = scmp.eq.s32.totalorder %s23, 0
      %p76 = por %p74, %p75
      %s77 = ssub.s32 %s17, %s24
      %p78 = scmp.eq.s32.totalorder %s77, 0
      %s80 = sadd.s32 %s79, 1
      %s81 = scalar_select %p78, %s79, %s80
      %p84 = pneg %p78
      %p85 = scmp.eq.s32.totalorder %s17, 1
      %p86 = por %p84, %p85
      %p87 = scmp.ne.s32.totalorder %s79, %s82
      %p88 = scmp.eq.s32.totalorder %s17, 0
      %p89 = por %p87, %p88
      %p90 = scmp.ne.s32.totalorder %s79, %s82
      %p91 = scmp.eq.s32.totalorder %s22, 1
      %p92 = por %p90, %p91
      %p93 = scmp.ne.s32.totalorder %s82, %s83
      %p94 = scmp.eq.s32.totalorder %s22, 0
      %p95 = por %p93, %p94
      %p96 = scmp.ne.s32.totalorder %s82, %s83
      %p97 = scmp.eq.s32.totalorder %s23, 1
      %p98 = por %p96, %p97
      %p100 = scmp.ne.s32.totalorder %s83, %s99
      %p101 = scmp.eq.s32.totalorder %s23, 0
      %p102 = por %p100, %p101
      %p103 = scmp.le.s32.totalorder 1, %s17
      %p104 = scmp.lt.s32.totalorder %s17, 3
      %p105 = pnand %p103, %p104
      %p106 = pneg %p105
      // Predicated region
      $region9: #{tpu_custom_call.1} parent=5 // pred_check
        _
      $region10: #{tpu_custom_call.1} parent=5 // pred_check_branch
        %108 = sbr.rel (%p105) target = $region12
      $region11: #{tpu_custom_call.1} parent=5 // pred_region
        %s109 = ssub.s32 %s17, 1
      $region12: #{tpu_custom_call.1} parent=5 // pred_fallthru
        _
      %p110 = scmp.lt.s32.totalorder %s17, 2
      // Predicated region
      $region13: #{tpu_custom_call.1} parent=5 // pred_check
        %p111 = pneg %p110
      $region14: #{tpu_custom_call.1} parent=5 // pred_check_branch
        %113 = sbr.rel (%p111) target = $region16
      $region15: #{tpu_custom_call.1} parent=5 // pred_region
        // Predicated region
        $region17: #{tpu_custom_call.1} parent=15 // pred_check
          %p114 = pneg %p37
        $region18: #{tpu_custom_call.1} parent=15 // pred_check_branch
          %116 = sbr.rel (%p114) target = $region20
        $region19: #{tpu_custom_call.1} parent=15 // pred_region
          %s117 = sand.u32 %s27, 1
          %s118 = scalar_lea.sflag [#allocation3], %s117
          %s119 = sand.u32 %s27, 1
          %s120 = smul.addr %s119, 8
          %s121 = scalar_lea.vmem [#allocation2], %s120
          %123 = vsyncadd %s118, 0
          %s124 = smul.addr %s17, 2
          %s125 = smul.addr %s124, 4
          %s126 = scalar_lea.hbm %s0, %s125
          %s128 = sshll.u32 %s126, 4
          %s129 = int_to_ptr.hbm [resolvable:$true] %s128
          %s130 = sshll.u32 %s121, 4
          %s131 = int_to_ptr.vmem [resolvable:$true] %s130
          %133 = dma.hbm_to_vmem [thread:$0]  %s129, 128, %s131, %s118
        $region20: #{tpu_custom_call.1} parent=15 // pred_fallthru
          _
        // Predicated region
        $region21: #{tpu_custom_call.1} parent=15 // pred_check
          %p134 = pneg %p63
        $region22: #{tpu_custom_call.1} parent=15 // pred_check_branch
          %136 = sbr.rel (%p134) target = $region24
        $region23: #{tpu_custom_call.1} parent=15 // pred_region
          %s137 = sand.u32 %s53, 1
          %s138 = scalar_lea.sflag [#allocation6], %s137
          %s139 = sand.u32 %s53, 1
          %s140 = smul.addr %s139, 512
          %s141 = scalar_lea.vmem [#allocation5], %s140
          %143 = vsyncadd %s138, 0
          %s144 = smul.addr %s17, 64
          %s145 = smul.addr %s144, 8
          %s146 = scalar_lea.hbm %s1, %s145
          %s147 = sshll.u32 %s146, 4
          %s148 = int_to_ptr.hbm [resolvable:$true] %s147
          %s149 = sshll.u32 %s141, 4
          %s150 = int_to_ptr.vmem [resolvable:$true] %s149
          %155 = dma.hbm_to_vmem [thread:$0]  %s148, 8192, %s150, %s138, 256, 256, 16
        $region24: #{tpu_custom_call.1} parent=15 // pred_fallthru
          _
      $region16: #{tpu_custom_call.1} parent=5 // pred_fallthru
        _
      %p156 = scmp.le.s32.totalorder 1, %s17
      %p157 = scmp.lt.s32.totalorder %s17, 3
      %p158 = pnand %p156, %p157
      %p159 = pneg %p158
      // Predicated region
      $region25: #{tpu_custom_call.1} parent=5 // pred_check
        _
      $region26: #{tpu_custom_call.1} parent=5 // pred_check_branch
        %161 = sbr.rel (%p158) target = $region28
      $region27: #{tpu_custom_call.1} parent=5 // pred_region
        %s162 = ssub.s32 %s17, 1
        %s163 = sand.u32 %s30, 1
        %s164 = scalar_lea.sflag [#allocation3], %s163
        %s165 = sand.u32 %s30, 1
        %s166 = smul.addr %s165, 8
        %s167 = scalar_lea.vmem [#allocation2], %s166
        // Predicated region
        $region29: #{tpu_custom_call.1} parent=27 // pred_check
          %p168 = pneg %p43
        $region30: #{tpu_custom_call.1} parent=27 // pred_check_branch
          %170 = sbr.rel (%p168) target = $region32
        $region31: #{tpu_custom_call.1} parent=27 // pred_region
          %172 = dma.done %s164, 128
        $region32: #{tpu_custom_call.1} parent=27 // pred_fallthru
          _
        %s173 = sand.u32 %s56, 1
        %s174 = scalar_lea.sflag [#allocation6], %s173
        %s175 = sand.u32 %s56, 1
        %s176 = smul.addr %s175, 512
        %s177 = scalar_lea.vmem [#allocation5], %s176
        // Predicated region
        $region33: #{tpu_custom_call.1} parent=27 // pred_check
          %p178 = pneg %p69
        $region34: #{tpu_custom_call.1} parent=27 // pred_check_branch
          %180 = sbr.rel (%p178) target = $region36
        $region35: #{tpu_custom_call.1} parent=27 // pred_region
          %182 = dma.done %s174, 8192
        $region36: #{tpu_custom_call.1} parent=27 // pred_fallthru
          _
        %s183 = sand.u32 %s30, 1
        %s184 = scalar_lea.sflag [#allocation3], %s183
        %s185 = sand.u32 %s30, 1
        %s186 = smul.addr %s185, 8
        %s187 = scalar_lea.vmem [#allocation2], %s186
        %p188 = pneg %p43
        %p189 = pneg %p40
        %s190 = sand.u32 %s56, 1
        %s191 = scalar_lea.sflag [#allocation6], %s190
        %s192 = sand.u32 %s56, 1
        %s193 = smul.addr %s192, 512
        %s194 = scalar_lea.vmem [#allocation5], %s193
        %p195 = pneg %p69
        %p196 = pneg %p66
        %p197 = pneg %p95
        %p198 = pneg %p92
        %s199 = sand.u32 %s82, 1
        %s200 = scalar_lea.sflag [#allocation4], %s199
        %s201 = sand.u32 %s82, 1
        %s202 = smul.addr %s201, 8
        %s203 = scalar_lea.vmem [#allocation7], %s202
        %v204 = vld [vmem:[%s167] sm:$0xff]
        %v205 = vld [vmem:[%s177] sm:$0xff]
        %v206 = vld [vmem:[%s177 + $0x8] sm:$0xff]
        %v207 = vld [vmem:[%s177 + $0x10] sm:$0xff]
        %v208 = vld [vmem:[%s177 + $0x18] sm:$0xff]
        %v209 = vld [vmem:[%s177 + $0x20] sm:$0xff]
        %v210 = vld [vmem:[%s177 + $0x28] sm:$0xff]
        %v211 = vld [vmem:[%s177 + $0x30] sm:$0xff]
        %v212 = vld [vmem:[%s177 + $0x38] sm:$0xff]
        %v213 = vld [vmem:[%s177 + $0x40] sm:$0xff]
        %v214 = vld [vmem:[%s177 + $0x48] sm:$0xff]
        %v215 = vld [vmem:[%s177 + $0x50] sm:$0xff]
        %v216 = vld [vmem:[%s177 + $0x58] sm:$0xff]
        %v217 = vld [vmem:[%s177 + $0x60] sm:$0xff]
        %v218 = vld [vmem:[%s177 + $0x68] sm:$0xff]
        %v219 = vld [vmem:[%s177 + $0x70] sm:$0xff]
        %v220 = vld [vmem:[%s177 + $0x78] sm:$0xff]
        %v221 = vld [vmem:[%s177 + $0x80] sm:$0xff]
        %v222 = vld [vmem:[%s177 + $0x88] sm:$0xff]
        %v223 = vld [vmem:[%s177 + $0x90] sm:$0xff]
        %v224 = vld [vmem:[%s177 + $0x98] sm:$0xff]
        %v225 = vld [vmem:[%s177 + $0xa0] sm:$0xff]
        %v226 = vld [vmem:[%s177 + $0xa8] sm:$0xff]
        %v227 = vld [vmem:[%s177 + $0xb0] sm:$0xff]
        %v228 = vld [vmem:[%s177 + $0xb8] sm:$0xff]
        %v229 = vld [vmem:[%s177 + $0xc0] sm:$0xff]
        %v230 = vld [vmem:[%s177 + $0xc8] sm:$0xff]
        %v231 = vld [vmem:[%s177 + $0xd0] sm:$0xff]
        %v232 = vld [vmem:[%s177 + $0xd8] sm:$0xff]
        %v233 = vld [vmem:[%s177 + $0xe0] sm:$0xff]
        %v234 = vld [vmem:[%s177 + $0xe8] sm:$0xff]
        %v235 = vld [vmem:[%s177 + $0xf0] sm:$0xff]
        %v236 = vld [vmem:[%s177 + $0xf8] sm:$0xff]
        %v237 = vld [vmem:[%s177 + $0x100] sm:$0xff]
        %v238 = vld [vmem:[%s177 + $0x108] sm:$0xff]
        %v239 = vld [vmem:[%s177 + $0x110] sm:$0xff]
        %v240 = vld [vmem:[%s177 + $0x118] sm:$0xff]
        %v241 = vld [vmem:[%s177 + $0x120] sm:$0xff]
        %v242 = vld [vmem:[%s177 + $0x128] sm:$0xff]
        %v243 = vld [vmem:[%s177 + $0x130] sm:$0xff]
        %v244 = vld [vmem:[%s177 + $0x138] sm:$0xff]
        %v245 = vld [vmem:[%s177 + $0x140] sm:$0xff]
        %v246 = vld [vmem:[%s177 + $0x148] sm:$0xff]
        %v247 = vld [vmem:[%s177 + $0x150] sm:$0xff]
        %v248 = vld [vmem:[%s177 + $0x158] sm:$0xff]
        %v249 = vld [vmem:[%s177 + $0x160] sm:$0xff]
        %v250 = vld [vmem:[%s177 + $0x168] sm:$0xff]
        %v251 = vld [vmem:[%s177 + $0x170] sm:$0xff]
        %v252 = vld [vmem:[%s177 + $0x178] sm:$0xff]
        %v253 = vld [vmem:[%s177 + $0x180] sm:$0xff]
        %v254 = vld [vmem:[%s177 + $0x188] sm:$0xff]
        %v255 = vld [vmem:[%s177 + $0x190] sm:$0xff]
        %v256 = vld [vmem:[%s177 + $0x198] sm:$0xff]
        %v257 = vld [vmem:[%s177 + $0x1a0] sm:$0xff]
        %v258 = vld [vmem:[%s177 + $0x1a8] sm:$0xff]
        %v259 = vld [vmem:[%s177 + $0x1b0] sm:$0xff]
        %v260 = vld [vmem:[%s177 + $0x1b8] sm:$0xff]
        %v261 = vld [vmem:[%s177 + $0x1c0] sm:$0xff]
        %v262 = vld [vmem:[%s177 + $0x1c8] sm:$0xff]
        %v263 = vld [vmem:[%s177 + $0x1d0] sm:$0xff]
        %v264 = vld [vmem:[%s177 + $0x1d8] sm:$0xff]
        %v265 = vld [vmem:[%s177 + $0x1e0] sm:$0xff]
        %v266 = vld [vmem:[%s177 + $0x1e8] sm:$0xff]
        %v267 = vld [vmem:[%s177 + $0x1f0] sm:$0xff]
        %v268 = vld [vmem:[%s177 + $0x1f8] sm:$0xff]
        %270 = vst [vmem:[#allocation1] ss:$2 sm:$0xff] %v204
        %v271 = vld.sshfl [vmem:[#allocation1] sm:$0xff pattern:$0x75316420]
        %v272 = vld.sshfl [vmem:[#allocation1 + $0x8] sm:$0xff pattern:$0x75316420]
        %275 = vmatpush.msra.mxu0 %v235
        %276 = vmatpush.msra.mxu0 %v233
        %277 = vmatpush.msra.mxu0 %v231
        %278 = vmatpush.msra.mxu0 %v229
        %279 = vmatpush.msra.mxu0 %v227
        %280 = vmatpush.msra.mxu0 %v225
        %281 = vmatpush.msra.mxu0 %v223
        %282 = vmatpush.msra.mxu0 %v221
        %283 = vmatpush.msra.mxu0 %v219
        %284 = vmatpush.msra.mxu0 %v217
        %285 = vmatpush.msra.mxu0 %v215
        %286 = vmatpush.msra.mxu0 %v213
        %287 = vmatpush.msra.mxu0 %v211
        %288 = vmatpush.msra.mxu0 %v209
        %289 = vmatpush.msra.mxu0 %v207
        %290 = vmatpush.msra.mxu0 %v205
        %291 = vmatmul.f32.gmra.mxu0 %v271
        %v292 = vpop.f32.mrf.mxu0
        %v293 = vadd.f32 0.0, %v292
        %294 = vdwg.mxu0
        %295 = vmatpush.msra.mxu0 %v267
        %296 = vmatpush.msra.mxu0 %v265
        %297 = vmatpush.msra.mxu0 %v263
        %298 = vmatpush.msra.mxu0 %v261
        %299 = vmatpush.msra.mxu0 %v259
        %300 = vmatpush.msra.mxu0 %v257
        %301 = vmatpush.msra.mxu0 %v255
        %302 = vmatpush.msra.mxu0 %v253
        %303 = vmatpush.msra.mxu0 %v251
        %304 = vmatpush.msra.mxu0 %v249
        %305 = vmatpush.msra.mxu0 %v247
        %306 = vmatpush.msra.mxu0 %v245
        %307 = vmatpush.msra.mxu0 %v243
        %308 = vmatpush.msra.mxu0 %v241
        %309 = vmatpush.msra.mxu0 %v239
        %310 = vmatpush.msra.mxu0 %v237
        %311 = vmatmul.f32.gmra.mxu0 %v272
        %v312 = vpop.f32.mrf.mxu0
        %v313 = vadd.f32 %v293, %v312
        %314 = vdwg.mxu0
        %315 = vmatpush.msra.mxu0 %v236
        %316 = vmatpush.msra.mxu0 %v234
        %317 = vmatpush.msra.mxu0 %v232
        %318 = vmatpush.msra.mxu0 %v230
        %319 = vmatpush.msra.mxu0 %v228
        %320 = vmatpush.msra.mxu0 %v226
        %321 = vmatpush.msra.mxu0 %v224
        %322 = vmatpush.msra.mxu0 %v222
        %323 = vmatpush.msra.mxu0 %v220
        %324 = vmatpush.msra.mxu0 %v218
        %325 = vmatpush.msra.mxu0 %v216
        %326 = vmatpush.msra.mxu0 %v214
        %327 = vmatpush.msra.mxu0 %v212
        %328 = vmatpush.msra.mxu0 %v210
        %329 = vmatpush.msra.mxu0 %v208
        %330 = vmatpush.msra.mxu0 %v206
        %331 = vmatmul.f32.gmra.mxu0 %v271
        %v332 = vpop.f32.mrf.mxu0
        %v333 = vadd.f32 0.0, %v332
        %334 = vdwg.mxu0
        %335 = vmatpush.msra.mxu0 %v268
        %336 = vmatpush.msra.mxu0 %v266
        %337 = vmatpush.msra.mxu0 %v264
        %338 = vmatpush.msra.mxu0 %v262
        %339 = vmatpush.msra.mxu0 %v260
        %340 = vmatpush.msra.mxu0 %v258
        %341 = vmatpush.msra.mxu0 %v256
        %342 = vmatpush.msra.mxu0 %v254
        %343 = vmatpush.msra.mxu0 %v252
        %344 = vmatpush.msra.mxu0 %v250
        %345 = vmatpush.msra.mxu0 %v248
        %346 = vmatpush.msra.mxu0 %v246
        %347 = vmatpush.msra.mxu0 %v244
        %348 = vmatpush.msra.mxu0 %v242
        %349 = vmatpush.msra.mxu0 %v240
        %350 = vmatpush.msra.mxu0 %v238
        %351 = vmatmul.f32.gmra.mxu0 %v272
        %v352 = vpop.f32.mrf.mxu0
        %v353 = vadd.f32 %v333, %v352
        %354 = vdwg.mxu0
        %v357 = vrot.slane %v353, 4
        %vm358 = vcmask 1043456
        %v359 = vsel %vm358, %v313, %v357
        %361 = vst [vmem:[%s203] sm:$0xff] %v359
        %s362 = sand.u32 %s82, 1
        %s363 = scalar_lea.sflag [#allocation4], %s362
        %s364 = sand.u32 %s82, 1
        %s365 = smul.addr %s364, 8
        %s366 = scalar_lea.vmem [#allocation7], %s365
        // Predicated region
        $region37: #{tpu_custom_call.1} parent=27 // pred_check
          %p367 = pneg %p92
        $region38: #{tpu_custom_call.1} parent=27 // pred_check_branch
          %369 = sbr.rel (%p367) target = $region40
        $region39: #{tpu_custom_call.1} parent=27 // pred_region
          %371 = vsyncadd %s363, 0
          %s372 = smul.addr %s22, 2
          %s373 = smul.addr %s372, 4
          %s374 = scalar_lea.hbm %s2, %s373
          %s376 = sshll.u32 %s366, 4
          %s377 = int_to_ptr.vmem [resolvable:$true] %s376
          %s378 = sshll.u32 %s374, 4
          %s379 = int_to_ptr.hbm [resolvable:$true] %s378
          %381 = dma.vmem_to_hbm [thread:$0]  %s377, 128, %s379, %s363
        $region40: #{tpu_custom_call.1} parent=27 // pred_fallthru
          _
      $region28: #{tpu_custom_call.1} parent=5 // pred_fallthru
        _
      %p382 = scmp.le.s32.totalorder 2, %s17
      // Predicated region
      $region41: #{tpu_custom_call.1} parent=5 // pred_check
        %p383 = pneg %p382
      $region42: #{tpu_custom_call.1} parent=5 // pred_check_branch
        %385 = sbr.rel (%p383) target = $region44
      $region43: #{tpu_custom_call.1} parent=5 // pred_region
        %s386 = ssub.s32 %s17, 2
        // Predicated region
        $region45: #{tpu_custom_call.1} parent=43 // pred_check
          %p387 = pneg %p98
        $region46: #{tpu_custom_call.1} parent=43 // pred_check_branch
          %389 = sbr.rel (%p387) target = $region48
        $region47: #{tpu_custom_call.1} parent=43 // pred_region
          %s390 = sand.u32 %s83, 1
          %s391 = scalar_lea.sflag [#allocation4], %s390
          %s392 = sand.u32 %s83, 1
          %s393 = smul.addr %s392, 8
          %s394 = scalar_lea.vmem [#allocation7], %s393
          %396 = dma.done %s391, 128
        $region48: #{tpu_custom_call.1} parent=43 // pred_fallthru
          _
      $region44: #{tpu_custom_call.1} parent=5 // pred_fallthru
        _
    $region6: #{tpu_custom_call.1} parent=1 // loop_footer
      %s21 = sadd.s32 1, %s17
    $region7: #{tpu_custom_call.1} parent=1 // loop_footer_branch
      %16 = sbr.rel target = $region3
    $region8: #{tpu_custom_call.1} parent=1 // loop_exit
      _
    %397 = vsyncpa [#allocation3], 1
    %s398 = scalar_lea.sflag [#allocation3], 1
    %399 = vsyncpa %s398, 1
    %400 = vsyncpa [#allocation6], 1
    %s401 = scalar_lea.sflag [#allocation6], 1
    %402 = vsyncpa %s401, 1
    %403 = vsyncpa [#allocation4], 1
    %s404 = scalar_lea.sflag [#allocation4], 1
    %405 = vsyncpa %s404, 1

</llo_original>
